<compile_context>
chip_gen: v7x
topology: tpu7x:2x2x1
jax: 0.10.0
libtpu: 0.0.40
codegen_flags: <defaults>
</compile_context>

<pallas_src>
import functools

import jax
import jax.numpy as jnp
from jax import lax
from jax.experimental import pallas as pl
from jax.experimental.pallas import tpu as pltpu


def _pbv_kernel(x_ref, o_ref, acc_ref, *, hw_total, hw_tile, n_frames):
    # x_ref block: (1, 3, N, hw_tile)   o_ref block: (1, 1, N)   acc_ref: (3, N)
    hw = pl.program_id(1)
    num_hw = pl.num_programs(1)
    is_last = hw == num_hw - 1
    rem = hw_total % hw_tile  # static python int

    @pl.when(hw == 0)
    def _init():
        acc_ref[...] = jnp.zeros_like(acc_ref)

    def _accum(mask_tail):
        # cast from native dtype per tile (no wrapper-side cast: HBM-bound read
        # stays at native width for bf16 / uint8 frames)
        x = x_ref[0].astype(jnp.float32)                  # (3, N, hw_tile)
        if mask_tail:
            lane = lax.broadcasted_iota(jnp.int32, x.shape, dimension=2)
            x = jnp.where(lane < rem, x, 0.0)             # mask ragged last tile
        acc_ref[...] += jnp.sum(x, axis=-1)               # (3, N)

    if rem == 0:
        # HW is a multiple of the tile: never pay iota/cmp/select.
        _accum(False)
    else:
        # steady-state path: plain cast + add
        @pl.when(jnp.logical_not(is_last))
        def _full():
            _accum(False)

        # ragged tail: masked path, paid exactly once per batch
        @pl.when(is_last)
        def _tail():
            _accum(True)

    # --- epilogue: tiny per-batch statistics + closed-form 3x3 solve ---------
    @pl.when(is_last)
    def _epilogue():
        n = n_frames
        m = acc_ref[...] * (1.0 / hw_total)                        # (3, N) spatial means
        sig_mean = jnp.sum(m, axis=1, keepdims=True) * (1.0 / n)   # (3, 1)
        cmat = m / sig_mean                                        # (3, N) normalized signals

        # unbiased variance per channel (torch std/var default correction=1)
        ch_mean = jnp.sum(cmat, axis=1, keepdims=True) * (1.0 / n)       # (3, 1)
        d = cmat - ch_mean
        var = jnp.sum(d * d, axis=1, keepdims=True) * (1.0 / (n - 1))    # (3, 1)
        var_sum = var[0:1, :] + var[1:2, :] + var[2:3, :]                # (1, 1)
        pbv = jnp.sqrt(var) / jnp.sqrt(var_sum)                          # (3, 1)

        # Q = C C^T via six lane reductions (symmetric; stays off the MXU)
        c0, c1, c2 = cmat[0:1, :], cmat[1:2, :], cmat[2:3, :]
        q00 = jnp.sum(c0 * c0, axis=1, keepdims=True)
        q01 = jnp.sum(c0 * c1, axis=1, keepdims=True)
        q02 = jnp.sum(c0 * c2, axis=1, keepdims=True)
        q11 = jnp.sum(c1 * c1, axis=1, keepdims=True)
        q12 = jnp.sum(c1 * c2, axis=1, keepdims=True)
        q22 = jnp.sum(c2 * c2, axis=1, keepdims=True)

        # Jacobi (diagonal) scaling: A = D Q D, D = diag(1/sqrt(q_ii)) — unit
        # diagonal, bounded entries; solution is mathematically unchanged.
        d0, d1, d2 = lax.rsqrt(q00), lax.rsqrt(q11), lax.rsqrt(q22)
        a01 = q01 * d0 * d1
        a02 = q02 * d0 * d2
        a12 = q12 * d1 * d2
        r0 = pbv[0:1, :] * d0
        r1 = pbv[1:2, :] * d1
        r2 = pbv[2:3, :] * d2

        # Adjugate solve of the scaled symmetric 3x3 (replaces torch.linalg.solve).
        # The 1/det factor is dropped on purpose: it scales W uniformly and
        # cancels exactly in A / B below (and avoids inf for near-singular Q).
        c00 = 1.0 - a12 * a12
        c11 = 1.0 - a02 * a02
        c22 = 1.0 - a01 * a01
        c01 = a02 * a12 - a01
        c02 = a01 * a12 - a02
        c12 = a01 * a02 - a12
        y0 = c00 * r0 + c01 * r1 + c02 * r2
        y1 = c01 * r0 + c11 * r1 + c12 * r2
        y2 = c02 * r0 + c12 * r1 + c22 * r2
        w0, w1, w2 = y0 * d0, y1 * d1, y2 * d2             # W (up to uniform scale)

        # bvp = (C^T W) / (pbv^T W)  — uniform scale on W cancels here
        a_num = w0 * c0 + w1 * c1 + w2 * c2                                # (1, N)
        b_den = pbv[0:1, :] * w0 + pbv[1:2, :] * w1 + pbv[2:3, :] * w2     # (1, 1)
        o_ref[0] = (a_num / b_den).astype(o_ref.dtype)


def _vmem_capacity_bytes():
    # Generation-aware VMEM capacity; conservative fallback if the query fails.
    try:
        info = pltpu.get_tpu_info()
        cap = getattr(info, "vmem_capacity_bytes", None)
        if cap:
            return int(cap)
    except Exception:
        pass
    return 128 * 1024 * 1024  # v5e / v6e physical; still safe-ish fallback on v7x


def _pick_hw_tile(n_frames, hw_total, itemsize, vmem_cap):
    # Per-input-buffer budget = VMEM capacity / 8 (double-buffered input =
    # capacity/4): ~16 MiB/buffer on v5e/v6e (128 MiB), ~8 MiB on v7x (64 MiB).
    # No fixed lane clamp — fill the byte budget so per-step overhead (~0.35us)
    # stays small relative to the DMA.
    budget_bytes = max(vmem_cap // 8, 2 * 1024 * 1024)
    t = budget_bytes // max(1, 3 * n_frames * itemsize)
    t = max(128, (t // 128) * 128)
    return hw_total if hw_total <= t else t


def pbv_forward(batch_x, *, hw_tile=None):
    """batch_x: (B, 3, N, H, W) any float/int dtype -> (B, N) float32."""
    B, C, N, H, W = batch_x.shape
    assert C == 3, "PBV expects 3 color channels"
    assert N >= 2, "PBV needs at least 2 frames (unbiased variance)"
    HW = H * W
    xr = batch_x.reshape(B, C, N, HW)          # free reshape; NO dtype cast here
    itemsize = jnp.dtype(xr.dtype).itemsize

    vmem_cap = _vmem_capacity_bytes()
    if hw_tile is None:
        hw_tile = _pick_hw_tile(N, HW, itemsize, vmem_cap)
    num_hw = pl.cdiv(HW, hw_tile)

    # Explicit scoped-VMEM limit: double-buffered input + scratch + headroom,
    # never below the common 32 MiB default, never above 3/4 of physical.
    in_tile_bytes = 3 * N * hw_tile * itemsize
    need = 2 * in_tile_bytes + 3 * N * 4 + 2 * N * 4 + (4 << 20)
    vmem_limit = int(min(max(need, 32 << 20), (vmem_cap * 3) // 4))

    cost = pl.CostEstimate(
        flops=int(B * 3 * N * HW + B * 64 * N),
        transcendentals=int(16 * B),
        bytes_accessed=int(B * 3 * N * HW * itemsize + B * N * 4),
    )

    kernel = functools.partial(_pbv_kernel, hw_total=HW, hw_tile=hw_tile, n_frames=N)
    out = pl.pallas_call(
        kernel,
        out_shape=jax.ShapeDtypeStruct((B, 1, N), jnp.float32),
        grid=(B, num_hw),
        in_specs=[pl.BlockSpec((1, C, N, hw_tile), lambda b, hw: (b, 0, 0, hw))],
        out_specs=pl.BlockSpec((1, 1, N), lambda b, hw: (b, 0, 0)),
        scratch_shapes=[pltpu.VMEM((3, N), jnp.float32)],
        compiler_params=pltpu.CompilerParams(
            dimension_semantics=("parallel", "arbitrary"),
            vmem_limit_bytes=vmem_limit),
        cost_estimate=cost,
    )(xr)
    return out.reshape(B, N)


def pbv_reference(batch_x):
    """Pure-JAX reference mirroring the PyTorch module."""
    m = jnp.mean(batch_x.astype(jnp.float32), axis=(3, 4))   # (B, 3, N)
    sig_mean = jnp.mean(m, axis=2)                           # (B, 3)
    norm = m / sig_mean[:, :, None]                          # (B, 3, N)
    var = jnp.var(norm, axis=2, ddof=1)                      # (B, 3)
    pbv_n = jnp.sqrt(var)
    pbv_d = jnp.sqrt(jnp.sum(var, axis=1, keepdims=True))
    pbv = pbv_n / pbv_d                                      # (B, 3)
    Q = jnp.einsum("bcn,bdn->bcd", norm, norm)               # (B, 3, 3)
    Wv = jnp.linalg.solve(Q, pbv[..., None])[..., 0]         # (B, 3)
    A = jnp.einsum("bcn,bc->bn", norm, Wv)                   # (B, N)
    Bden = jnp.sum(pbv * Wv, axis=1, keepdims=True)          # (B, 1)
    return A / Bden


if __name__ == "__main__":
    key = jax.random.PRNGKey(0)
    B, C, N, H, W = 2, 3, 8, 16, 16
    k1, k2 = jax.random.split(key)
    # temporally-varying base per (b, c, n) + small spatial noise so the
    # normalized signals have real variance (well-conditioned Q)
    base = jax.random.uniform(k1, (B, C, N, 1, 1), minval=0.5, maxval=2.0)
    noise = 0.05 * jax.random.uniform(k2, (B, C, N, H, W))
    x = (base + noise).astype(jnp.float32)

    out = jax.block_until_ready(pbv_forward(x))
    assert out.shape == (B, N)
    assert bool(jnp.all(jnp.isfinite(out)))

    ref = pbv_reference(x)
    rel_err = float(jnp.max(jnp.abs(out - ref) / (jnp.abs(ref) + 1e-3)))
    assert rel_err < 5e-2, f"mismatch vs reference: {rel_err}"

    print("KERNEL_OK")
</pallas_src>

<mosaic_0001>
module attributes {stable_mosaic.version = 11 : i64} {
  func.func @_pbv_kernel(%arg0: i32, %arg1: i32, %arg2: memref<1x3x8x256xf32, #tpu.memory_space<vmem>>, %arg3: memref<1x1x8xf32, #tpu.memory_space<vmem>>, %arg4: memref<3x8xf32, #tpu.memory_space<vmem>>) attributes {dimension_semantics = [#tpu.dimension_semantics<parallel>, #tpu.dimension_semantics<arbitrary>], iteration_bounds = array<i64: 2, 1>, scalar_prefetch = 0 : i64, scratch_operands = 1 : i64, tpu.core_type = #tpu.core_type<tc>, window_params = [{transform_indices = @transform_0, window_bounds = array<i64: 1, 3, 8, 256>}, {transform_indices = @transform_1, window_bounds = array<i64: 1, 1, 8>}]} {
    %c0_i32 = arith.constant 0 : i32
    %0 = arith.cmpi eq, %arg1, %c0_i32 : i32
    %c0_i32_0 = arith.constant 0 : i32
    %1 = arith.cmpi eq, %arg1, %c0_i32_0 : i32
    %2 = arith.extui %1 : i1 to i32
    %c0_i32_1 = arith.constant 0 : i32
    %3 = arith.cmpi ne, %2, %c0_i32_1 : i32
    scf.if %3 {
      %cst_10 = arith.constant 0.000000e+00 : f32
      %12 = vector.broadcast %cst_10 : f32 to vector<3x8xf32>
      %c0_11 = arith.constant 0 : index
      %c0_12 = arith.constant 0 : index
      %13 = vector.load %arg4[%c0_11, %c0_12] : memref<3x8xf32, #tpu.memory_space<vmem>>, vector<3x8xf32>
      tpu.vector_store %arg4[%c0_11, %c0_12], %12 {strides = array<i32>} : memref<3x8xf32, #tpu.memory_space<vmem>>, vector<3x8xf32>,
    } else {
    }
    %c0 = arith.constant 0 : index
    %c0_2 = arith.constant 0 : index
    %c0_3 = arith.constant 0 : index
    %c0_4 = arith.constant 0 : index
    %4 = vector.load %arg2[%c0, %c0_2, %c0_3, %c0_4] : memref<1x3x8x256xf32, #tpu.memory_space<vmem>>, vector<1x3x8x256xf32>
    %5 = vector.shape_cast %4 : vector<1x3x8x256xf32> to vector<3x8x256xf32>
    %c0_5 = arith.constant 0 : index
    %c0_6 = arith.constant 0 : index
    %6 = vector.load %arg4[%c0_5, %c0_6] : memref<3x8xf32, #tpu.memory_space<vmem>>, vector<3x8xf32>
    %cst = arith.constant dense<0.000000e+00> : vector<3x8xf32>
    %7 = vector.multi_reduction <add>, %5, %cst [2] : vector<3x8x256xf32> to vector<3x8xf32>
    %8 = arith.addf %6, %7 : vector<3x8xf32>
    %c0_7 = arith.constant 0 : index
    %c0_8 = arith.constant 0 : index
    %9 = vector.load %arg4[%c0_7, %c0_8] : memref<3x8xf32, #tpu.memory_space<vmem>>, vector<3x8xf32>
    tpu.vector_store %arg4[%c0_7, %c0_8], %8 {strides = array<i32>} : memref<3x8xf32, #tpu.memory_space<vmem>>, vector<3x8xf32>,
    %10 = arith.extui %0 : i1 to i32
    %c0_i32_9 = arith.constant 0 : i32
    %11 = arith.cmpi ne, %10, %c0_i32_9 : i32
    scf.if %11 {
      %c0_10 = arith.constant 0 : index
      %c0_11 = arith.constant 0 : index
      %12 = vector.load %arg4[%c0_10, %c0_11] : memref<3x8xf32, #tpu.memory_space<vmem>>, vector<3x8xf32>
      %cst_12 = arith.constant 3.906250e-03 : f32
      %13 = vector.broadcast %cst_12 : f32 to vector<3x8xf32>
      %14 = arith.mulf %12, %13 : vector<3x8xf32>
      %cst_13 = arith.constant dense<0.000000e+00> : vector<3xf32>
      %15 = vector.multi_reduction <add>, %14, %cst_13 [1] : vector<3x8xf32> to vector<3xf32>
      %16 = vector.shape_cast %15 : vector<3xf32> to vector<3x1xf32>
      %cst_14 = arith.constant 1.250000e-01 : f32
      %17 = vector.broadcast %cst_14 : f32 to vector<3x1xf32>
      %18 = arith.mulf %16, %17 : vector<3x1xf32>
      %19 = vector.broadcast %18 : vector<3x1xf32> to vector<3x8xf32>
      %20 = arith.divf %14, %19 : vector<3x8xf32>
      %cst_15 = arith.constant dense<0.000000e+00> : vector<3xf32>
      %21 = vector.multi_reduction <add>, %20, %cst_15 [1] : vector<3x8xf32> to vector<3xf32>
      %22 = vector.shape_cast %21 : vector<3xf32> to vector<3x1xf32>
      %cst_16 = arith.constant 1.250000e-01 : f32
      %23 = vector.broadcast %cst_16 : f32 to vector<3x1xf32>
      %24 = arith.mulf %22, %23 : vector<3x1xf32>
      %25 = vector.broadcast %24 : vector<3x1xf32> to vector<3x8xf32>
      %26 = arith.subf %20, %25 : vector<3x8xf32>
      %27 = arith.mulf %26, %26 : vector<3x8xf32>
      %cst_17 = arith.constant dense<0.000000e+00> : vector<3xf32>
      %28 = vector.multi_reduction <add>, %27, %cst_17 [1] : vector<3x8xf32> to vector<3xf32>
      %29 = vector.shape_cast %28 : vector<3xf32> to vector<3x1xf32>
      %cst_18 = arith.constant 0.142857149 : f32
      %30 = vector.broadcast %cst_18 : f32 to vector<3x1xf32>
      %31 = arith.mulf %29, %30 : vector<3x1xf32>
      %32 = vector.extract_strided_slice %31 {offsets = [0, 0], sizes = [1, 1], strides = [1, 1]} : vector<3x1xf32> to vector<1x1xf32>
      %33 = vector.extract_strided_slice %31 {offsets = [1, 0], sizes = [1, 1], strides = [1, 1]} : vector<3x1xf32> to vector<1x1xf32>
      %34 = arith.addf %32, %33 : vector<1x1xf32>
      %35 = vector.extract_strided_slice %31 {offsets = [2, 0], sizes = [1, 1], strides = [1, 1]} : vector<3x1xf32> to vector<1x1xf32>
      %36 = arith.addf %34, %35 : vector<1x1xf32>
      %37 = math.sqrt %31 : vector<3x1xf32>
      %38 = math.sqrt %36 : vector<1x1xf32>
      %39 = vector.broadcast %38 : vector<1x1xf32> to vector<3x1xf32>
      %40 = arith.divf %37, %39 : vector<3x1xf32>
      %41 = vector.extract_strided_slice %20 {offsets = [0, 0], sizes = [1, 8], strides = [1, 1]} : vector<3x8xf32> to vector<1x8xf32>
      %42 = vector.extract_strided_slice %20 {offsets = [1, 0], sizes = [1, 8], strides = [1, 1]} : vector<3x8xf32> to vector<1x8xf32>
      %43 = vector.extract_strided_slice %20 {offsets = [2, 0], sizes = [1, 8], strides = [1, 1]} : vector<3x8xf32> to vector<1x8xf32>
      %44 = arith.mulf %41, %41 : vector<1x8xf32>
      %cst_19 = arith.constant dense<0.000000e+00> : vector<1xf32>
      %45 = vector.multi_reduction <add>, %44, %cst_19 [1] : vector<1x8xf32> to vector<1xf32>
      %46 = vector.shape_cast %45 : vector<1xf32> to vector<1x1xf32>
      %47 = arith.mulf %41, %42 : vector<1x8xf32>
      %cst_20 = arith.constant dense<0.000000e+00> : vector<1xf32>
      %48 = vector.multi_reduction <add>, %47, %cst_20 [1] : vector<1x8xf32> to vector<1xf32>
      %49 = vector.shape_cast %48 : vector<1xf32> to vector<1x1xf32>
      %50 = arith.mulf %41, %43 : vector<1x8xf32>
      %cst_21 = arith.constant dense<0.000000e+00> : vector<1xf32>
      %51 = vector.multi_reduction <add>, %50, %cst_21 [1] : vector<1x8xf32> to vector<1xf32>
      %52 = vector.shape_cast %51 : vector<1xf32> to vector<1x1xf32>
      %53 = arith.mulf %42, %42 : vector<1x8xf32>
      %cst_22 = arith.constant dense<0.000000e+00> : vector<1xf32>
      %54 = vector.multi_reduction <add>, %53, %cst_22 [1] : vector<1x8xf32> to vector<1xf32>
      %55 = vector.shape_cast %54 : vector<1xf32> to vector<1x1xf32>
      %56 = arith.mulf %42, %43 : vector<1x8xf32>
      %cst_23 = arith.constant dense<0.000000e+00> : vector<1xf32>
      %57 = vector.multi_reduction <add>, %56, %cst_23 [1] : vector<1x8xf32> to vector<1xf32>
      %58 = vector.shape_cast %57 : vector<1xf32> to vector<1x1xf32>
      %59 = arith.mulf %43, %43 : vector<1x8xf32>
      %cst_24 = arith.constant dense<0.000000e+00> : vector<1xf32>
      %60 = vector.multi_reduction <add>, %59, %cst_24 [1] : vector<1x8xf32> to vector<1xf32>
      %61 = vector.shape_cast %60 : vector<1xf32> to vector<1x1xf32>
      %62 = math.rsqrt %46 : vector<1x1xf32>
      %63 = math.rsqrt %55 : vector<1x1xf32>
      %64 = math.rsqrt %61 : vector<1x1xf32>
      %65 = arith.mulf %49, %62 : vector<1x1xf32>
      %66 = arith.mulf %65, %63 : vector<1x1xf32>
      %67 = arith.mulf %52, %62 : vector<1x1xf32>
      %68 = arith.mulf %67, %64 : vector<1x1xf32>
      %69 = arith.mulf %58, %63 : vector<1x1xf32>
      %70 = arith.mulf %69, %64 : vector<1x1xf32>
      %71 = vector.extract_strided_slice %40 {offsets = [0, 0], sizes = [1, 1], strides = [1, 1]} : vector<3x1xf32> to vector<1x1xf32>
      %72 = arith.mulf %71, %62 : vector<1x1xf32>
      %73 = vector.extract_strided_slice %40 {offsets = [1, 0], sizes = [1, 1], strides = [1, 1]} : vector<3x1xf32> to vector<1x1xf32>
      %74 = arith.mulf %73, %63 : vector<1x1xf32>
      %75 = vector.extract_strided_slice %40 {offsets = [2, 0], sizes = [1, 1], strides = [1, 1]} : vector<3x1xf32> to vector<1x1xf32>
      %76 = arith.mulf %75, %64 : vector<1x1xf32>
      %77 = arith.mulf %70, %70 : vector<1x1xf32>
      %cst_25 = arith.constant 1.000000e+00 : f32
      %78 = vector.broadcast %cst_25 : f32 to vector<1x1xf32>
      %79 = arith.subf %78, %77 : vector<1x1xf32>
      %80 = arith.mulf %68, %68 : vector<1x1xf32>
      %cst_26 = arith.constant 1.000000e+00 : f32
      %81 = vector.broadcast %cst_26 : f32 to vector<1x1xf32>
      %82 = arith.subf %81, %80 : vector<1x1xf32>
      %83 = arith.mulf %66, %66 : vector<1x1xf32>
      %cst_27 = arith.constant 1.000000e+00 : f32
      %84 = vector.broadcast %cst_27 : f32 to vector<1x1xf32>
      %85 = arith.subf %84, %83 : vector<1x1xf32>
      %86 = arith.mulf %68, %70 : vector<1x1xf32>
      %87 = arith.subf %86, %66 : vector<1x1xf32>
      %88 = arith.mulf %66, %70 : vector<1x1xf32>
      %89 = arith.subf %88, %68 : vector<1x1xf32>
      %90 = arith.mulf %66, %68 : vector<1x1xf32>
      %91 = arith.subf %90, %70 : vector<1x1xf32>
      %92 = arith.mulf %79, %72 : vector<1x1xf32>
      %93 = arith.mulf %87, %74 : vector<1x1xf32>
      %94 = arith.addf %92, %93 : vector<1x1xf32>
      %95 = arith.mulf %89, %76 : vector<1x1xf32>
      %96 = arith.addf %94, %95 : vector<1x1xf32>
      %97 = arith.mulf %87, %72 : vector<1x1xf32>
      %98 = arith.mulf %82, %74 : vector<1x1xf32>
      %99 = arith.addf %97, %98 : vector<1x1xf32>
      %100 = arith.mulf %91, %76 : vector<1x1xf32>
      %101 = arith.addf %99, %100 : vector<1x1xf32>
      %102 = arith.mulf %89, %72 : vector<1x1xf32>
      %103 = arith.mulf %91, %74 : vector<1x1xf32>
      %104 = arith.addf %102, %103 : vector<1x1xf32>
      %105 = arith.mulf %85, %76 : vector<1x1xf32>
      %106 = arith.addf %104, %105 : vector<1x1xf32>
      %107 = arith.mulf %96, %62 : vector<1x1xf32>
      %108 = arith.mulf %101, %63 : vector<1x1xf32>
      %109 = arith.mulf %106, %64 : vector<1x1xf32>
      %110 = vector.broadcast %107 : vector<1x1xf32> to vector<1x8xf32>
      %111 = arith.mulf %110, %41 : vector<1x8xf32>
      %112 = vector.broadcast %108 : vector<1x1xf32> to vector<1x8xf32>
      %113 = arith.mulf %112, %42 : vector<1x8xf32>
      %114 = arith.addf %111, %113 : vector<1x8xf32>
      %115 = vector.broadcast %109 : vector<1x1xf32> to vector<1x8xf32>
      %116 = arith.mulf %115, %43 : vector<1x8xf32>
      %117 = arith.addf %114, %116 : vector<1x8xf32>
      %118 = vector.extract_strided_slice %40 {offsets = [0, 0], sizes = [1, 1], strides = [1, 1]} : vector<3x1xf32> to vector<1x1xf32>
      %119 = arith.mulf %118, %107 : vector<1x1xf32>
      %120 = vector.extract_strided_slice %40 {offsets = [1, 0], sizes = [1, 1], strides = [1, 1]} : vector<3x1xf32> to vector<1x1xf32>
      %121 = arith.mulf %120, %108 : vector<1x1xf32>
      %122 = arith.addf %119, %121 : vector<1x1xf32>
      %123 = vector.extract_strided_slice %40 {offsets = [2, 0], sizes = [1, 1], strides = [1, 1]} : vector<3x1xf32> to vector<1x1xf32>
      %124 = arith.mulf %123, %109 : vector<1x1xf32>
      %125 = arith.addf %122, %124 : vector<1x1xf32>
      %126 = vector.broadcast %125 : vector<1x1xf32> to vector<1x8xf32>
      %127 = arith.divf %117, %126 : vector<1x8xf32>
      %c0_28 = arith.constant 0 : index
      %c0_29 = arith.constant 0 : index
      %c0_30 = arith.constant 0 : index
      %128 = vector.load %arg3[%c0_28, %c0_29, %c0_30] : memref<1x1x8xf32, #tpu.memory_space<vmem>>, vector<1x1x8xf32>
      %129 = vector.shape_cast %128 : vector<1x1x8xf32> to vector<1x8xf32>
      %130 = vector.shape_cast %127 : vector<1x8xf32> to vector<1x1x8xf32>
      tpu.vector_store %arg3[%c0_28, %c0_29, %c0_30], %130 {strides = array<i32>} : memref<1x1x8xf32, #tpu.memory_space<vmem>>, vector<1x1x8xf32>,
    } else {
    }
    return
  }
  func.func @transform_0(%arg0: i32, %arg1: i32) -> (i32, i32, i32, i32) {
    %c0_i32 = arith.constant 0 : i32
    %c0_i32_0 = arith.constant 0 : i32
    %c0_i32_1 = arith.constant 0 : i32
    return %arg0, %c0_i32, %c0_i32_0, %arg1 : i32, i32, i32, i32
  }
  func.func @transform_1(%arg0: i32, %arg1: i32) -> (i32, i32, i32) {
    %c0_i32 = arith.constant 0 : i32
    %c0_i32_0 = arith.constant 0 : i32
    %c0_i32_1 = arith.constant 0 : i32
    return %arg0, %c0_i32, %c0_i32_0 : i32, i32, i32
  }
}

</mosaic_0001>

<llo_original>
// kernel: tpu_custom_call.1
$region0: #{tpu_custom_call.1}
  #allocation0 [shape = 'u32[]', space=smem, size = 0x4, offset = 0x4, fixed_abs, tag = 'smem constant byte address 0x4 - core index']
  #allocation1 [shape = 'u32[144,128]{1,0:T(1,128)}', space=vmem, size = 0x12000, scoped, tag = 'internal scratch']
  #allocation2 [shape = 'f32[3,8]{1,0:T(4,128)}', space=vmem, size = 0x800, scoped, tag = 'scratch operand']
  %s0 = inlined_call_operand.hbm [shape: f32[2,3,8,256], index: 0, kind: input, shape index: {}]
  %s1 = inlined_call_operand.hbm [shape: f32[2,1,8], index: 1, kind: output, shape index: {}]
  %s2 = sld [smem:[#allocation0]]
  $region49: #{tpu_custom_call.1} parent=0
    _
  %s4 = ssub.s32 1, %s2
  %s5 = scalar_select 0, %s4, %s2
  $region1: #{tpu_custom_call.1} parent=0
    #allocation3 [shape = 'u8[49152]{0}', space=vmem, size = 0xc000, scoped, tag = 'input window, operand 0']
    #allocation4 [shape = 's32[2]{0}', space=sflag, size = 0x8, scoped, tag = 'scoped memory for tpu_custom_call.1']
    #allocation5 [shape = 's32[2]{0}', space=sflag, size = 0x8, scoped, tag = 'scoped memory for tpu_custom_call.1']
    #allocation6 [shape = 'u8[1024]{0}', space=vmem, size = 0x400, scoped, tag = 'output window, operand 0']
    %6 = vsyncpa [#allocation4], 0
    %s7 = scalar_lea.sflag [#allocation4], 1
    %8 = vsyncpa %s7, 0
    %9 = vsyncpa [#allocation5], 0
    %s10 = scalar_lea.sflag [#allocation5], 1
    %11 = vsyncpa %s10, 0
    loop: start=0, step=1, limit=4
    $region2: #{tpu_custom_call.1} parent=1 // loop_pre_header
      _
    $region3: #{tpu_custom_call.1} parent=1 // loop_header
      %s13 = sphi 0, %s17
      %p14 = scmp.ge.s32.totalorder %s13, 4
      %s20 = sphi 0, %s32
      %s21 = sphi 0, %s28
      %s22 = sphi 0, %s20
      %s23 = sphi 0, %s21
      %s24 = sphi 0, %s22
      %s25 = sphi 0, %s23
      %s37 = sphi 0, %s39
      %s40 = sphi 0, %s37
      %s41 = sphi 0, %s40
      %s57 = sphi 0, %s41
      %s63 = sphi 0, %s65
      %s66 = sphi 0, %s63
      %s67 = sphi 0, %s66
      %s83 = sphi 0, %s67
    $region4: #{tpu_custom_call.1} parent=1 // loop_header_branch
      %16 = sbr.rel (%p14) target = $region8
    $region5: #{tpu_custom_call.1} parent=1 // loop_body
      %s18 = ssub.s32 %s13, 1
      %s19 = ssub.s32 %s13, 2
      %s26 = sadd.s32 1, %s21
      %p27 = scmp.ge.s32.totalorder %s26, 1
      %s28 = scalar_select %p27, 0, %s26
      %s29 = sadd.s32 1, %s20
      %s30 = scalar_select %p27, %s29, %s20
      %p31 = scmp.ge.s32.totalorder %s30, 2
      %s32 = scalar_select %p31, 0, %s30
      %s33 = ssub.s32 %s20, %s32
      %s34 = ssub.s32 %s21, %s28
      %s35 = sor.u32 %s33, %s34
      %p36 = scmp.eq.s32.totalorder %s35, 0
      %s38 = sadd.s32 %s37, 1
      %s39 = scalar_select %p36, %s37, %s38
      %p42 = pneg %p36
      %p43 = scmp.eq.s32.totalorder %s13, 1
      %p44 = por %p42, %p43
      %p45 = scmp.ne.s32.totalorder %s37, %s40
      %p46 = scmp.eq.s32.totalorder %s13, 0
      %p47 = por %p45, %p46
      %p48 = scmp.ne.s32.totalorder %s37, %s40
      %p49 = scmp.eq.s32.totalorder %s18, 1
      %p50 = por %p48, %p49
      %p51 = scmp.ne.s32.totalorder %s40, %s41
      %p52 = scmp.eq.s32.totalorder %s18, 0
      %p53 = por %p51, %p52
      %p54 = scmp.ne.s32.totalorder %s40, %s41
      %p55 = scmp.eq.s32.totalorder %s19, 1
      %p56 = por %p54, %p55
      %p58 = scmp.ne.s32.totalorder %s41, %s57
      %p59 = scmp.eq.s32.totalorder %s19, 0
      %p60 = por %p58, %p59
      %s61 = ssub.s32 %s20, %s32
      %p62 = scmp.eq.s32.totalorder %s61, 0
      %s64 = sadd.s32 %s63, 1
      %s65 = scalar_select %p62, %s63, %s64
      %p68 = pneg %p62
      %p69 = scmp.eq.s32.totalorder %s13, 1
      %p70 = por %p68, %p69
      %p71 = scmp.ne.s32.totalorder %s63, %s66
      %p72 = scmp.eq.s32.totalorder %s13, 0
      %p73 = por %p71, %p72
      %p74 = scmp.ne.s32.totalorder %s63, %s66
      %p75 = scmp.eq.s32.totalorder %s18, 1
      %p76 = por %p74, %p75
      %p77 = scmp.ne.s32.totalorder %s66, %s67
      %p78 = scmp.eq.s32.totalorder %s18, 0
      %p79 = por %p77, %p78
      %p80 = scmp.ne.s32.totalorder %s66, %s67
      %p81 = scmp.eq.s32.totalorder %s19, 1
      %p82 = por %p80, %p81
      %p84 = scmp.ne.s32.totalorder %s67, %s83
      %p85 = scmp.eq.s32.totalorder %s19, 0
      %p86 = por %p84, %p85
      %p87 = scmp.le.s32.totalorder 1, %s13
      %p88 = scmp.lt.s32.totalorder %s13, 3
      %p89 = pnand %p87, %p88
      %p90 = pneg %p89
      // Predicated region
      $region9: #{tpu_custom_call.1} parent=5 // pred_check
        _
      $region10: #{tpu_custom_call.1} parent=5 // pred_check_branch
        %92 = sbr.rel (%p89) target = $region12
      $region11: #{tpu_custom_call.1} parent=5 // pred_region
        %s93 = ssub.s32 %s13, 1
      $region12: #{tpu_custom_call.1} parent=5 // pred_fallthru
        _
      %p94 = scmp.lt.s32.totalorder %s13, 2
      // Predicated region
      $region13: #{tpu_custom_call.1} parent=5 // pred_check
        %p95 = pneg %p94
      $region14: #{tpu_custom_call.1} parent=5 // pred_check_branch
        %97 = sbr.rel (%p95) target = $region16
      $region15: #{tpu_custom_call.1} parent=5 // pred_region
        // Predicated region
        $region17: #{tpu_custom_call.1} parent=15 // pred_check
          %p98 = pneg %p47
        $region18: #{tpu_custom_call.1} parent=15 // pred_check_branch
          %100 = sbr.rel (%p98) target = $region20
        $region19: #{tpu_custom_call.1} parent=15 // pred_region
          %s101 = sand.u32 %s37, 1
          %s102 = scalar_lea.sflag [#allocation4], %s101
          %s103 = sand.u32 %s37, 1
          %s104 = smul.addr %s103, 48
          %s105 = scalar_lea.vmem [#allocation3], %s104
          %s106 = smul.u32 2, %s21
          %s108 = ssub.s32 768, 768
          %109 = vsyncadd %s102, %s108
          %s110 = smul.addr %s20, 6
          %s111 = sadd.s32 %s106, %s110
          %s112 = smul.addr %s111, 128
          %s113 = scalar_lea.hbm %s0, %s112
          %s114 = sshll.u32 %s105, 4
          %s115 = int_to_ptr.vmem [resolvable:$true] %s114
          %120 = dma.hbm_to_vmem [thread:$0]  %s113, 768, %s115, %s102, 256, 256, 16
        $region20: #{tpu_custom_call.1} parent=15 // pred_fallthru
          _
      $region16: #{tpu_custom_call.1} parent=5 // pred_fallthru
        _
      %p121 = scmp.le.s32.totalorder 1, %s13
      %p122 = scmp.lt.s32.totalorder %s13, 3
      %p123 = pnand %p121, %p122
      %p124 = pneg %p123
      // Predicated region
      $region21: #{tpu_custom_call.1} parent=5 // pred_check
        _
      $region22: #{tpu_custom_call.1} parent=5 // pred_check_branch
        %126 = sbr.rel (%p123) target = $region24
      $region23: #{tpu_custom_call.1} parent=5 // pred_region
        %s127 = ssub.s32 %s13, 1
        %s128 = sand.u32 %s40, 1
        %s129 = scalar_lea.sflag [#allocation4], %s128
        %s130 = sand.u32 %s40, 1
        %s131 = smul.addr %s130, 48
        %s132 = scalar_lea.vmem [#allocation3], %s131
        // Predicated region
        $region25: #{tpu_custom_call.1} parent=23 // pred_check
          %p133 = pneg %p53
        $region26: #{tpu_custom_call.1} parent=23 // pred_check_branch
          %135 = sbr.rel (%p133) target = $region28
        $region27: #{tpu_custom_call.1} parent=23 // pred_region
          %136 = dma.done %s129, 768
        $region28: #{tpu_custom_call.1} parent=23 // pred_fallthru
          _
        %s137 = sand.u32 %s40, 1
        %s138 = scalar_lea.sflag [#allocation4], %s137
        %s139 = sand.u32 %s40, 1
        %s140 = smul.addr %s139, 48
        %s141 = scalar_lea.vmem [#allocation3], %s140
        %p142 = pneg %p53
        %p143 = pneg %p50
        %p144 = pneg %p79
        %p145 = pneg %p76
        %s146 = sand.u32 %s66, 1
        %s147 = scalar_lea.sflag [#allocation5], %s146
        %s148 = sand.u32 %s66, 1
        %s149 = scalar_lea.vmem [#allocation6], %s148
        %s150 = smul.u32 2, %s23
        %p151 = scmp.eq.s32.totalorder %s23, 0
        // Predicated region
        $region29: #{tpu_custom_call.1} parent=23 // pred_check
          %p152 = pneg %p151
        $region30: #{tpu_custom_call.1} parent=23 // pred_check_branch
          %154 = sbr.rel (%p152) target = $region32
        $region31: #{tpu_custom_call.1} parent=23 // pred_region
          %vm155 = vcmask 59392
          %156 = vst.msk [vmem:[#allocation2] sm:$0x7] %vm155, 0.0
        $region32: #{tpu_custom_call.1} parent=23 // pred_fallthru
          _
        %v157 = vld [vmem:[%s132] sm:$0xff]
        %v158 = vld [vmem:[%s132 + $0x8] sm:$0xff]
        %v159 = vld [vmem:[%s132 + $0x10] sm:$0xff]
        %v160 = vld [vmem:[%s132 + $0x18] sm:$0xff]
        %v161 = vld [vmem:[%s132 + $0x20] sm:$0xff]
        %v162 = vld [vmem:[%s132 + $0x28] sm:$0xff]
        %v163 = vld [vmem:[#allocation2] sm:$0x7]
        %v164 = vadd.f32 %v157, %v158
        %165 = vadd.xlane.f32.xlu0 %v164
        %v166 = vpop.xlane.xlu0 %165
        %v167 = vadd.f32 %v159, %v160
        %168 = vadd.xlane.f32.xlu0 %v167
        %v169 = vpop.xlane.xlu0 %168
        %v170 = vadd.f32 %v161, %v162
        %171 = vadd.xlane.f32.xlu0 %v170
        %v172 = vpop.xlane.xlu0 %171
        %v176 = vlaneseq
        %v177 = vand.u32 %v176, 127
        %v178 = vlaneseq
        %v179 = vshrl.u32 %v178, 7
        %v180 = vsub.s32 %v177, %v179
        %v181 = vrot.slane %v166, %v180
        %v182 = vlaneseq
        %v183 = vshrl.u32 %v182, 7
        %v184 = vsub.s32 %v177, %v183
        %v185 = vrot.slane %v169, %v184
        %v186 = vlaneseq
        %v187 = vshrl.u32 %v186, 7
        %v188 = vsub.s32 %v177, %v187
        %v189 = vrot.slane %v172, %v188
        %vm190 = vcmask 1041409
        %v191 = vsel %vm190, %v185, %v181
        %vm192 = vcmask 1042434
        %v193 = vsel %vm192, %v189, %v191
        %v195 = vadd.f32 %v163, %v193
        %vm196 = vcmask 59392
        %197 = vst.msk [vmem:[#allocation2] sm:$0x7] %vm196, %v195
        // Predicated region
        $region33: #{tpu_custom_call.1} parent=23 // pred_check
          %p198 = pneg %p151
        $region34: #{tpu_custom_call.1} parent=23 // pred_check_branch
          %200 = sbr.rel (%p198) target = $region36
        $region35: #{tpu_custom_call.1} parent=23 // pred_region
          %v201 = vld [vmem:[#allocation2] sm:$0x7]
          %v202 = vmul.f32 %v201, 0.00390625
          %v203 = vsel %vm196, %v202, 0.0
          %204 = vadd.xlane.f32.xlu0 %v203
          %v205 = vpop.xlane.xlu0 %204
          %v206 = vmul.f32 %v205, 0.125
          %v207 = vrcp.pop %v206
          %v208 = vmul.f32 %v202, %v207
          %v209 = vsel %vm196, %v208, 0.0
          %210 = vadd.xlane.f32.xlu0 %v209
          %v211 = vpop.xlane.xlu0 %210
          %v212 = vmul.f32 %v211, 0.125
          %v213 = vsub.f32 %v208, %v212
          %v214 = vmul.f32 %v213, %v213
          %v215 = vsel %vm196, %v214, 0.0
          %216 = vadd.xlane.f32.xlu0 %v215
          %v217 = vpop.xlane.xlu0 %216
          %v218 = vmul.f32 %v217, 0.14285715
          %v220 = vrot.slane %v218, 1
          %v222 = vadd.f32 %v218, %v220
          %v223 = vrot.slane %v218, 2
          %v225 = vadd.f32 %v222, %v223
          %v226 = vrsqrt.pop %v218
          %v227 = vmul.f32 %v218, %v226
          %vm228 = vcmp.eq.f32.partialorder %v218, inf
          %v229 = vsel %vm228, %v218, %v227
          %vm230 = vcmp.eq.f32.partialorder %v218, 0.0
          %v231 = vand.u32 %v218, 2147483648
          %v232 = vsel %vm230, %v231, %v229
          %v233 = vrsqrt.pop %v225
          %v234 = vmul.f32 %v225, %v233
          %vm235 = vcmp.eq.f32.partialorder %v225, inf
          %v236 = vsel %vm235, %v225, %v234
          %vm237 = vcmp.eq.f32.partialorder %v225, 0.0
          %v238 = vand.u32 %v225, 2147483648
          %v239 = vsel %vm237, %v238, %v236
          %v240 = vlaneseq
          %v241 = vshrl.u32 %v240, 7
          %v242 = vsub.s32 0, %v241
          %v243 = vrot.slane %v239, %v242
          %v244 = vrcp.pop %v243
          %v245 = vmul.f32 %v232, %v244
          %v246 = vmul.f32 %v208, %v208
          %vm247 = vcmask 57344
          %v248 = vsel %vm247, %v246, 0.0
          %249 = vadd.xlane.f32.xlu0 %v248
          %v250 = vpop.xlane.xlu0 %249
          %v252 = vrot.slane %v208, 1
          %v254 = vmul.f32 %v208, %v252
          %v255 = vsel %vm247, %v254, 0.0
          %256 = vadd.xlane.f32.xlu0 %v255
          %v257 = vpop.xlane.xlu0 %256
          %v258 = vrot.slane %v208, 2
          %v260 = vmul.f32 %v208, %v258
          %v261 = vsel %vm247, %v260, 0.0
          %262 = vadd.xlane.f32.xlu0 %v261
          %v263 = vpop.xlane.xlu0 %262
          %vm264 = vcmask 58369
          %v265 = vsel %vm264, %v246, 0.0
          %266 = vadd.xlane.f32.xlu0 %v265
          %v267 = vpop.xlane.xlu0 %266
          %v268 = vsel %vm264, %v254, 0.0
          %269 = vadd.xlane.f32.xlu0 %v268
          %v270 = vpop.xlane.xlu0 %269
          %vm271 = vcmask 59394
          %v272 = vsel %vm271, %v246, 0.0
          %273 = vadd.xlane.f32.xlu0 %v272
          %v274 = vpop.xlane.xlu0 %273
          %v275 = vrsqrt.pop %v250
          %v276 = vrsqrt.pop %v267
          %v277 = vrsqrt.pop %v274
          %v278 = vmul.f32 %v257, %v275
          %v280 = vrot.slane %v276, 1
          %v282 = vmul.f32 %v278, %v280
          %v283 = vmul.f32 %v263, %v275
          %v285 = vrot.slane %v277, 2
          %v287 = vmul.f32 %v283, %v285
          %v288 = vmul.f32 %v270, %v276
          %v289 = vrot.slane %v277, 1
          %v291 = vmul.f32 %v288, %v289
          %v292 = vmul.f32 %v245, %v275
          %v293 = vmul.f32 %v245, %v276
          %v294 = vmul.f32 %v245, %v277
          %v295 = vmul.f32 %v291, %v291
          %v296 = vsub.f32 1.0, %v295
          %v297 = vmul.f32 %v287, %v287
          %v298 = vsub.f32 1.0, %v297
          %v299 = vmul.f32 %v282, %v282
          %v300 = vsub.f32 1.0, %v299
          %v302 = vrot.slane %v291, 1
          %v304 = vmul.f32 %v287, %v302
          %v305 = vsub.f32 %v304, %v282
          %v306 = vmul.f32 %v282, %v302
          %v307 = vsub.f32 %v306, %v287
          %v308 = vmul.f32 %v282, %v287
          %v309 = vsub.f32 %v308, %v302
          %v311 = vrot.slane %v292, 7
          %v313 = vmul.f32 %v296, %v311
          %v315 = vrot.slane %v293, 1
          %v317 = vmul.f32 %v305, %v315
          %v319 = vrot.slane %v317, 7
          %v321 = vadd.f32 %v313, %v319
          %v323 = vrot.slane %v294, 2
          %v325 = vmul.f32 %v307, %v323
          %v327 = vrot.slane %v325, 7
          %v329 = vadd.f32 %v321, %v327
          %v330 = vmul.f32 %v305, %v292
          %v331 = vmul.f32 %v298, %v315
          %v332 = vadd.f32 %v330, %v331
          %v333 = vmul.f32 %v309, %v323
          %v334 = vadd.f32 %v332, %v333
          %v335 = vmul.f32 %v307, %v292
          %v336 = vmul.f32 %v309, %v315
          %v337 = vadd.f32 %v335, %v336
          %v338 = vmul.f32 %v300, %v323
          %v339 = vadd.f32 %v337, %v338
          %v341 = vrot.slane %v275, 7
          %v343 = vmul.f32 %v329, %v341
          %v344 = vmul.f32 %v334, %v280
          %v345 = vmul.f32 %v339, %v285
          %347 = vset.pattern.permute.xlu0 0
          %348 = vperm.xlu0 %347, %v343
          %v349 = vpop.permute.xlu0 %348
          %v351 = vrot.slane %v208, 7
          %v353 = vmul.f32 %v349, %v351
          %355 = vset.pattern.permute.xlu0 0
          %356 = vperm.xlu0 %355, %v344
          %v357 = vpop.permute.xlu0 %356
          %v359 = vmul.f32 %v357, %v252
          %v361 = vrot.slane %v359, 7
          %v363 = vadd.f32 %v353, %v361
          %365 = vset.pattern.permute.xlu0 0
          %366 = vperm.xlu0 %365, %v345
          %v367 = vpop.permute.xlu0 %366
          %v369 = vmul.f32 %v367, %v258
          %v371 = vrot.slane %v369, 7
          %v373 = vadd.f32 %v363, %v371
          %v374 = vrot.slane %v343, 1
          %v376 = vmul.f32 %v245, %v374
          %v377 = vrot.slane %v344, 7
          %v379 = vmul.f32 %v245, %v377
          %v381 = vrot.slane %v379, 1
          %v383 = vadd.f32 %v376, %v381
          %v384 = vrot.slane %v345, 6
          %v386 = vmul.f32 %v245, %v384
          %v388 = vrot.slane %v386, 2
          %v390 = vadd.f32 %v383, %v388
          %392 = vset.pattern.permute.xlu0 0
          %393 = vperm.xlu0 %392, %v390
          %v394 = vpop.permute.xlu0 %393
          %v395 = vrot.slane %v394, 7
          %v397 = vrcp.pop %v395
          %v398 = vmul.f32 %v373, %v397
          %399 = vst.msk [vmem:[%s149 - $0x1] sm:$0x2] %vm264, %v398
        $region36: #{tpu_custom_call.1} parent=23 // pred_fallthru
          _
        %s400 = sand.u32 %s66, 1
        %s401 = scalar_lea.sflag [#allocation5], %s400
        %s402 = sand.u32 %s66, 1
        %s403 = scalar_lea.vmem [#allocation6], %s402
        // Predicated region
        $region37: #{tpu_custom_call.1} parent=23 // pred_check
          %p404 = pneg %p76
        $region38: #{tpu_custom_call.1} parent=23 // pred_check_branch
          %406 = sbr.rel (%p404) target = $region40
        $region39: #{tpu_custom_call.1} parent=23 // pred_region
          %s408 = ssub.s32 16, 16
          %409 = vsyncadd %s401, %s408
          %s410 = smul.addr %s22, 16
          %s411 = scalar_lea.hbm %s1, %s410
          %s413 = sshll.u32 %s403, 4
          %s414 = int_to_ptr.vmem [resolvable:$true] %s413
          %416 = dma.vmem_to_hbm [thread:$0]  %s414, 16, %s411, %s401
        $region40: #{tpu_custom_call.1} parent=23 // pred_fallthru
          _
      $region24: #{tpu_custom_call.1} parent=5 // pred_fallthru
        _
      %p417 = scmp.le.s32.totalorder 2, %s13
      // Predicated region
      $region41: #{tpu_custom_call.1} parent=5 // pred_check
        %p418 = pneg %p417
      $region42: #{tpu_custom_call.1} parent=5 // pred_check_branch
        %420 = sbr.rel (%p418) target = $region44
      $region43: #{tpu_custom_call.1} parent=5 // pred_region
        %s421 = ssub.s32 %s13, 2
        // Predicated region
        $region45: #{tpu_custom_call.1} parent=43 // pred_check
          %p422 = pneg %p82
        $region46: #{tpu_custom_call.1} parent=43 // pred_check_branch
          %424 = sbr.rel (%p422) target = $region48
        $region47: #{tpu_custom_call.1} parent=43 // pred_region
          %s425 = sand.u32 %s67, 1
          %s426 = scalar_lea.sflag [#allocation5], %s425
          %s427 = sand.u32 %s67, 1
          %s428 = scalar_lea.vmem [#allocation6], %s427
          %429 = dma.done %s426, 16
        $region48: #{tpu_custom_call.1} parent=43 // pred_fallthru
          _
      $region44: #{tpu_custom_call.1} parent=5 // pred_fallthru
        _
    $region6: #{tpu_custom_call.1} parent=1 // loop_footer
      %s17 = sadd.s32 1, %s13
    $region7: #{tpu_custom_call.1} parent=1 // loop_footer_branch
      %12 = sbr.rel target = $region3
    $region8: #{tpu_custom_call.1} parent=1 // loop_exit
      _
    %430 = vsyncpa [#allocation4], 1
    %s431 = scalar_lea.sflag [#allocation4], 1
    %432 = vsyncpa %s431, 1
    %433 = vsyncpa [#allocation5], 1
    %s434 = scalar_lea.sflag [#allocation5], 1
    %435 = vsyncpa %s434, 1

</llo_original>
